<compile_context>
chip_gen: v5e
topology: v5e:2x2
jax: 0.10.0
libtpu: 0.0.40
codegen_flags: <defaults>
</compile_context>

<pallas_src>
import functools
import math

import jax
import jax.numpy as jnp
from jax.experimental import pallas as pl
from jax.experimental.pallas import tpu as pltpu


def _cheby_kernel(x_ref, w_ref, o_ref, *, n_terms):
    # x_ref: (tile_rows, tile_lanes)  slab of (N*D, H*W)
    # w_ref: (tile_rows, n_terms)     per-row weight table (channel-periodic)
    x = x_ref[...].astype(jnp.float32)
    w = w_ref[...].astype(jnp.float32)

    if n_terms == 1:
        o_ref[...] = jnp.broadcast_to(w[:, 0:1], x.shape).astype(o_ref.dtype)
        return

    # Clenshaw evaluation:  b_k = w_k + 2x*b_{k+1} - b_{k+2};  y = w_0 + x*b_1 - b_2
    two_x = x + x
    bk1 = jnp.broadcast_to(w[:, n_terms - 1:n_terms], x.shape)  # b_{n-1}
    bk2 = jnp.zeros_like(x)                                      # b_{n}
    for k in range(n_terms - 2, 0, -1):                          # static unroll (VPU)
        bk1, bk2 = w[:, k:k + 1] + two_x * bk1 - bk2, bk1
    y = w[:, 0:1] + x * bk1 - bk2

    o_ref[...] = y.astype(o_ref.dtype)


def _pick_tile(dim, quantum, target):
    """Largest multiple of `quantum` that divides `dim` and is <= target; else full dim."""
    if dim % quantum != 0:
        return dim  # full-extent block is always legal
    t = max(quantum, (min(target, dim) // quantum) * quantum)
    while dim % t != 0:
        t -= quantum
    return t


def chebyshev_activation(x, weight, *, target_rows=256, target_lanes=2048,
                         vmem_limit_bytes=48 * 1024 * 1024):
    """x: (N, D, *spatial); weight: (1, D, n)  -> same shape/dtype as x."""
    shape = x.shape
    N, D = shape[0], shape[1]
    spatial = math.prod(shape[2:]) if len(shape) > 2 else 1
    n_terms = weight.shape[-1]

    rows = N * D
    cols = spatial

    # Zero-copy views: no transpose, no pad.
    x2d = x.reshape(rows, cols)
    w_rows = jnp.tile(weight.reshape(D, n_terms), (N, 1))  # (N*D, n) tiny

    # Lane-dense, multi-hundred-KiB blocks; sizes divide the array so shapes stay static.
    tile_rows = _pick_tile(rows, 8, target_rows)
    tile_lanes = _pick_tile(cols, 128, target_lanes)
    grid = (rows // tile_rows, cols // tile_lanes)

    kernel = functools.partial(_cheby_kernel, n_terms=n_terms)

    out2d = pl.pallas_call(
        kernel,
        out_shape=jax.ShapeDtypeStruct((rows, cols), x.dtype),
        grid_spec=pltpu.PrefetchScalarGridSpec(
            num_scalar_prefetch=0,
            grid=grid,
            in_specs=[
                pl.BlockSpec((tile_rows, tile_lanes), lambda i, j: (i, j)),
                pl.BlockSpec((tile_rows, n_terms), lambda i, j: (i, 0)),
            ],
            out_specs=pl.BlockSpec((tile_rows, tile_lanes), lambda i, j: (i, j)),
        ),
        compiler_params=pltpu.CompilerParams(
            dimension_semantics=("parallel", "parallel"),
            vmem_limit_bytes=vmem_limit_bytes,
        ),
    )(x2d, w_rows)

    return out2d.reshape(shape)


def chebyshev_reference(x, weight):
    """Pure-JAX reference matching the PyTorch module."""
    shape = x.shape
    D = shape[1]
    n_terms = weight.shape[-1]
    xf = x.astype(jnp.float32)
    terms = [jnp.ones_like(xf), xf]
    while len(terms) < n_terms:
        terms.append(2.0 * xf * terms[-1] - terms[-2])
    B = jnp.stack(terms[:n_terms], axis=-1)                      # (N, D, *, n)
    e = B.ndim - 3
    w = weight.reshape(1, D, *([1] * e), n_terms).astype(jnp.float32)
    return (w * B).sum(axis=-1).astype(x.dtype)


if __name__ == "__main__":
    # Module config: input_size (channels) D = 4, n_degree = 4 -> n = 5 terms.
    N, D, H, W = 2, 4, 16, 16
    n_degree = 4
    n_terms = n_degree + 1

    key = jax.random.PRNGKey(0)
    kx, kw = jax.random.split(key)
    x = jax.random.normal(kx, (N, D, H, W), dtype=jnp.float32)
    # PyTorch init is zeros; use a deterministic non-trivial weight for a meaningful check.
    weight = jax.random.normal(kw, (1, D, n_terms), dtype=jnp.float32) * 0.1

    out = chebyshev_activation(x, weight)
    out = jax.block_until_ready(out)

    ref = chebyshev_reference(x, weight)
    assert out.shape == x.shape and out.dtype == x.dtype
    assert jnp.allclose(out, ref, atol=1e-5, rtol=1e-5)

    print("KERNEL_OK")
</pallas_src>

<mosaic_0001>
module attributes {stable_mosaic.version = 11 : i64} {
  func.func @_cheby_kernel(%arg0: i32, %arg1: i32, %arg2: memref<8x256xf32, #tpu.memory_space<vmem>>, %arg3: memref<8x5xf32, #tpu.memory_space<vmem>>, %arg4: memref<8x256xf32, #tpu.memory_space<vmem>>) attributes {dimension_semantics = [#tpu.dimension_semantics<parallel>, #tpu.dimension_semantics<parallel>], iteration_bounds = array<i64: 1, 1>, scalar_prefetch = 0 : i64, scratch_operands = 0 : i64, tpu.core_type = #tpu.core_type<tc>, window_params = [{transform_indices = @transform_0, window_bounds = array<i64: 8, 256>}, {transform_indices = @transform_1, window_bounds = array<i64: 8, 5>}, {transform_indices = @transform_2, window_bounds = array<i64: 8, 256>}]} {
    %c0 = arith.constant 0 : index
    %c0_0 = arith.constant 0 : index
    %0 = vector.load %arg2[%c0, %c0_0] : memref<8x256xf32, #tpu.memory_space<vmem>>, vector<8x256xf32>
    %c0_1 = arith.constant 0 : index
    %c0_2 = arith.constant 0 : index
    %1 = vector.load %arg3[%c0_1, %c0_2] : memref<8x5xf32, #tpu.memory_space<vmem>>, vector<8x5xf32>
    %2 = arith.addf %0, %0 : vector<8x256xf32>
    %3 = vector.extract_strided_slice %1 {offsets = [0, 4], sizes = [8, 1], strides = [1, 1]} : vector<8x5xf32> to vector<8x1xf32>
    %4 = vector.shape_cast %3 : vector<8x1xf32> to vector<8x1xf32>
    %5 = vector.broadcast %4 : vector<8x1xf32> to vector<8x256xf32>
    %cst = arith.constant 0.000000e+00 : f32
    %6 = vector.broadcast %cst : f32 to vector<8x256xf32>
    %7 = vector.extract_strided_slice %1 {offsets = [0, 3], sizes = [8, 1], strides = [1, 1]} : vector<8x5xf32> to vector<8x1xf32>
    %8 = arith.mulf %2, %5 : vector<8x256xf32>
    %9 = vector.broadcast %7 : vector<8x1xf32> to vector<8x256xf32>
    %10 = arith.addf %9, %8 : vector<8x256xf32>
    %11 = arith.subf %10, %6 : vector<8x256xf32>
    %12 = vector.extract_strided_slice %1 {offsets = [0, 2], sizes = [8, 1], strides = [1, 1]} : vector<8x5xf32> to vector<8x1xf32>
    %13 = arith.mulf %2, %11 : vector<8x256xf32>
    %14 = vector.broadcast %12 : vector<8x1xf32> to vector<8x256xf32>
    %15 = arith.addf %14, %13 : vector<8x256xf32>
    %16 = arith.subf %15, %5 : vector<8x256xf32>
    %17 = vector.extract_strided_slice %1 {offsets = [0, 1], sizes = [8, 1], strides = [1, 1]} : vector<8x5xf32> to vector<8x1xf32>
    %18 = arith.mulf %2, %16 : vector<8x256xf32>
    %19 = vector.broadcast %17 : vector<8x1xf32> to vector<8x256xf32>
    %20 = arith.addf %19, %18 : vector<8x256xf32>
    %21 = arith.subf %20, %11 : vector<8x256xf32>
    %22 = vector.extract_strided_slice %1 {offsets = [0, 0], sizes = [8, 1], strides = [1, 1]} : vector<8x5xf32> to vector<8x1xf32>
    %23 = arith.mulf %0, %21 : vector<8x256xf32>
    %24 = vector.broadcast %22 : vector<8x1xf32> to vector<8x256xf32>
    %25 = arith.addf %24, %23 : vector<8x256xf32>
    %26 = arith.subf %25, %16 : vector<8x256xf32>
    %c0_3 = arith.constant 0 : index
    %c0_4 = arith.constant 0 : index
    %27 = vector.load %arg4[%c0_3, %c0_4] : memref<8x256xf32, #tpu.memory_space<vmem>>, vector<8x256xf32>
    tpu.vector_store %arg4[%c0_3, %c0_4], %26 {strides = array<i32>} : memref<8x256xf32, #tpu.memory_space<vmem>>, vector<8x256xf32>,
    return
  }
  func.func @transform_0(%arg0: i32, %arg1: i32) -> (i32, i32) {
    %c0_i32 = arith.constant 0 : i32
    return %arg0, %arg1 : i32, i32
  }
  func.func @transform_1(%arg0: i32, %arg1: i32) -> (i32, i32) {
    %c0_i32 = arith.constant 0 : i32
    %c0_i32_0 = arith.constant 0 : i32
    return %arg0, %c0_i32 : i32, i32
  }
  func.func @transform_2(%arg0: i32, %arg1: i32) -> (i32, i32) {
    %c0_i32 = arith.constant 0 : i32
    return %arg0, %arg1 : i32, i32
  }
}

</mosaic_0001>

<llo_original>
// kernel: tpu_custom_call.1
$region0: #{tpu_custom_call.1}
  #allocation0 [shape = 'u32[]', space=smem, size = 0x4, offset = 0x4, fixed_abs, tag = 'smem constant byte address 0x4 - core index']
  #allocation1 [shape = 'u32[72,128]{1,0:T(1,128)}', space=vmem, size = 0x9000, scoped, tag = 'internal scratch']
  %s0 = inlined_call_operand.hbm [shape: f32[8,256], index: 0, kind: input, shape index: {}]
  %s1 = inlined_call_operand.hbm [shape: f32[8,5], index: 1, kind: input, shape index: {}]
  %s2 = inlined_call_operand.hbm [shape: f32[8,256], index: 2, kind: output, shape index: {}]
  %s3 = sld [smem:[#allocation0]]
  $region26: #{tpu_custom_call.1} parent=0
    _
  %s5 = ssub.s32 1, %s3
  %s6 = scalar_select 0, %s5, %s3
  $region1: #{tpu_custom_call.1} parent=0
    #allocation2 [shape = 'u8[8192]{0}', space=vmem, size = 0x2000, scoped, tag = 'input window, operand 0, single buffered']
    #allocation3 [shape = 's32[1]{0}', space=sflag, size = 0x4, scoped, tag = 'scoped memory for tpu_custom_call.1']
    #allocation4 [shape = 's32[1]{0}', space=sflag, size = 0x4, scoped, tag = 'scoped memory for tpu_custom_call.1']
    #allocation5 [shape = 'u8[4096]{0}', space=vmem, size = 0x1000, scoped, tag = 'input window, operand 1, single buffered']
    #allocation6 [shape = 's32[1]{0}', space=sflag, size = 0x4, scoped, tag = 'scoped memory for tpu_custom_call.1']
    #allocation7 [shape = 'u8[8192]{0}', space=vmem, size = 0x2000, scoped, tag = 'output window, operand 0, single buffered']
    %7 = vsyncpa [#allocation3], 0
    %8 = vsyncpa [#allocation6], 0
    %9 = vsyncpa [#allocation4], 0
    // Predicated region
    $region2: #{tpu_custom_call.1} parent=1 // pred_check
      _
    $region3: #{tpu_custom_call.1} parent=1 // pred_check_branch
      %11 = sbr.rel (0) target = $region5
    $region4: #{tpu_custom_call.1} parent=1 // pred_region
      %13 = vsyncadd [#allocation3], 0
      %s15 = sshll.u32 %s0, 4
      %s16 = int_to_ptr.hbm [resolvable:$true] %s15
      %s17 = sshll.u32 [#allocation2], 4
      %s18 = int_to_ptr.vmem [resolvable:$true] %s17
      %20 = dma.hbm_to_vmem [thread:$0]  %s16, 256, %s18, [#allocation3]
    $region5: #{tpu_custom_call.1} parent=1 // pred_fallthru
      _
    // Predicated region
    $region6: #{tpu_custom_call.1} parent=1 // pred_check
      _
    $region7: #{tpu_custom_call.1} parent=1 // pred_check_branch
      %22 = sbr.rel (0) target = $region9
    $region8: #{tpu_custom_call.1} parent=1 // pred_region
      %24 = vsyncadd [#allocation6], 0
      %s26 = sshll.u32 %s1, 4
      %s27 = int_to_ptr.hbm [resolvable:$true] %s26
      %s28 = sshll.u32 [#allocation5], 4
      %s29 = int_to_ptr.vmem [resolvable:$true] %s28
      %31 = dma.hbm_to_vmem [thread:$0]  %s27, 128, %s29, [#allocation6]
    $region9: #{tpu_custom_call.1} parent=1 // pred_fallthru
      _
    // Predicated region
    $region10: #{tpu_custom_call.1} parent=1 // pred_check
      _
    $region11: #{tpu_custom_call.1} parent=1 // pred_check_branch
      %33 = sbr.rel (0) target = $region13
    $region12: #{tpu_custom_call.1} parent=1 // pred_region
      %35 = dma.done [#allocation3], 256
    $region13: #{tpu_custom_call.1} parent=1 // pred_fallthru
      _
    // Predicated region
    $region14: #{tpu_custom_call.1} parent=1 // pred_check
      _
    $region15: #{tpu_custom_call.1} parent=1 // pred_check_branch
      %37 = sbr.rel (0) target = $region17
    $region16: #{tpu_custom_call.1} parent=1 // pred_region
      %39 = dma.done [#allocation6], 128
    $region17: #{tpu_custom_call.1} parent=1 // pred_fallthru
      _
    %v40 = vld [vmem:[#allocation2] sm:$0xff]
    %v41 = vld [vmem:[#allocation2 + $0x8] sm:$0xff]
    %v42 = vld [vmem:[#allocation5] sm:$0xff]
    %v43 = vadd.f32 %v40, %v40
    %v44 = vadd.f32 %v41, %v41
    %46 = vset.pattern.permute.xlu0 4
    %47 = vperm.xlu0 %46, %v42
    %v48 = vpop.permute.xlu0 %47
    %v50 = vmul.f32 %v43, %v48
    %v51 = vmul.f32 %v44, %v48
    %52 = vset.pattern.permute.xlu0 3
    %53 = vperm.xlu0 %52, %v42
    %v54 = vpop.permute.xlu0 %53
    %v56 = vadd.f32 %v54, %v50
    %v57 = vadd.f32 %v54, %v51
    %v58 = vmul.f32 %v43, %v56
    %v59 = vmul.f32 %v44, %v57
    %60 = vset.pattern.permute.xlu0 2
    %61 = vperm.xlu0 %60, %v42
    %v62 = vpop.permute.xlu0 %61
    %v64 = vadd.f32 %v62, %v58
    %v65 = vadd.f32 %v62, %v59
    %v66 = vsub.f32 %v64, %v48
    %v67 = vsub.f32 %v65, %v48
    %v68 = vmul.f32 %v43, %v66
    %v69 = vmul.f32 %v44, %v67
    %70 = vset.pattern.permute.xlu0 1
    %71 = vperm.xlu0 %70, %v42
    %v72 = vpop.permute.xlu0 %71
    %v74 = vadd.f32 %v72, %v68
    %v75 = vadd.f32 %v72, %v69
    %v76 = vsub.f32 %v74, %v56
    %v77 = vsub.f32 %v75, %v57
    %v78 = vmul.f32 %v40, %v76
    %v79 = vmul.f32 %v41, %v77
    %80 = vset.pattern.permute.xlu0 0
    %81 = vperm.xlu0 %80, %v42
    %v82 = vpop.permute.xlu0 %81
    %v84 = vadd.f32 %v82, %v78
    %v85 = vadd.f32 %v82, %v79
    %v86 = vsub.f32 %v84, %v66
    %v87 = vsub.f32 %v85, %v67
    %88 = vst [vmem:[#allocation7] sm:$0xff] %v86
    %89 = vst [vmem:[#allocation7 + $0x8] sm:$0xff] %v87
    // Predicated region
    $region18: #{tpu_custom_call.1} parent=1 // pred_check
      _
    $region19: #{tpu_custom_call.1} parent=1 // pred_check_branch
      %91 = sbr.rel (0) target = $region21
    $region20: #{tpu_custom_call.1} parent=1 // pred_region
      %93 = vsyncadd [#allocation4], 0
      %s95 = sshll.u32 [#allocation7], 4
      %s96 = int_to_ptr.vmem [resolvable:$true] %s95
      %s97 = sshll.u32 %s2, 4
      %s98 = int_to_ptr.hbm [resolvable:$true] %s97
      %100 = dma.vmem_to_hbm [thread:$0]  %s96, 256, %s98, [#allocation4]
    $region21: #{tpu_custom_call.1} parent=1 // pred_fallthru
      _
    // Predicated region
    $region22: #{tpu_custom_call.1} parent=1 // pred_check
      _
    $region23: #{tpu_custom_call.1} parent=1 // pred_check_branch
      %102 = sbr.rel (0) target = $region25
    $region24: #{tpu_custom_call.1} parent=1 // pred_region
      %104 = dma.done [#allocation4], 256
    $region25: #{tpu_custom_call.1} parent=1 // pred_fallthru
      _
    %105 = vsyncpa [#allocation3], 1
    %106 = vsyncpa [#allocation6], 1
    %107 = vsyncpa [#allocation4], 1

</llo_original>
